<compile_context>
chip_gen: v5e
topology: v5e:2x2
jax: 0.10.0
libtpu: 0.0.40
codegen_flags: <defaults>
</compile_context>

<pallas_src>
import functools
import math

import jax
import jax.numpy as jnp
from jax.experimental import pallas as pl
from jax.experimental.pallas import tpu as pltpu


# ----------------------------- helpers ------------------------------------- #
def _gelu_exact(x):
    # Matches torch.nn.functional.gelu (erf-based, non-approximate), in f32.
    return 0.5 * x * (1.0 + jax.lax.erf(x * (1.0 / math.sqrt(2.0))))


def _round_up(x, m):
    return ((x + m - 1) // m) * m


def _vmem_limit_bytes():
    """Generation-aware VMEM budget (v7x has 64 MiB/TC vs 128 MiB on v5e/v6e)."""
    try:
        cap = int(pltpu.get_tpu_info().vmem_capacity_bytes)
    except Exception:
        cap = 64 * 1024 * 1024  # conservative fallback (v7x per-TensorCore)
    # Leave headroom for compiler scratch; never ask for more than ~112 MiB.
    return min(cap * 3 // 4, 112 * 1024 * 1024)


def prepare_params(weight, bias):
    """One-time (model-init) parameter prep, hoisted out of the forward path.

    weight: (I, H) float32 (torch nn.Linear layout)  -> (H, I) bfloat16
    bias:   (I,)   float32                           -> (1, I) float32
    """
    w_bf = jnp.asarray(weight).T.astype(jnp.bfloat16)
    b_f32 = jnp.asarray(bias).reshape(1, -1).astype(jnp.float32)
    return w_bf, b_f32


# ------------------------------ kernel ------------------------------------- #
def _bert_intermediate_kernel(x_ref, w_ref, b_ref, o_ref, *, act):
    # x_ref: (tm, H) f32 (cast to bf16 in-kernel)  w_ref: (H, I) bf16 (resident)
    # b_ref: (1, I) f32                            o_ref: (tm, I) out_dtype
    x = x_ref[...].astype(jnp.bfloat16)
    acc = jnp.dot(x, w_ref[...], preferred_element_type=jnp.float32)
    acc = acc + b_ref[...]
    if act == "gelu":
        acc = _gelu_exact(acc)
    elif act == "relu":
        acc = jnp.maximum(acc, 0.0)
    else:
        raise ValueError(f"Unsupported activation function: {act}")
    o_ref[...] = acc.astype(o_ref.dtype)


# ------------------------------ wrapper ------------------------------------ #
def bert_intermediate(hidden_states, w_bf, b_f32, *, act="gelu",
                      out_dtype=jnp.bfloat16, tm_pref=512):
    """BertIntermediate forward.

    hidden_states: (..., H) float32 (or bfloat16)
    w_bf:          (H, I)   bfloat16  (from prepare_params)
    b_f32:         (1, I)   float32   (from prepare_params)
    returns:       (..., I) out_dtype (default bfloat16 — next matmul wants bf16)
    """
    orig_shape = hidden_states.shape
    H = orig_shape[-1]
    Hw, I = w_bf.shape
    assert Hw == H, f"weight hidden dim {Hw} != activation hidden dim {H}"

    x2d = hidden_states.reshape(-1, H)
    M = x2d.shape[0]

    # Token tile: MXU-friendly for large M, single sublane-aligned block for
    # small M.  M is zero-padded to a tile multiple (no ragged tail tiles).
    if M <= tm_pref:
        tm = _round_up(max(M, 1), 16)     # bf16 sublane-pack alignment
    else:
        tm = tm_pref                      # multiple of 128/256

    vmem_limit = _vmem_limit_bytes()
    x_bytes = jnp.dtype(x2d.dtype).itemsize
    out_bytes = jnp.dtype(out_dtype).itemsize

    def _working_set(t):
        return (2 * t * H * x_bytes       # streaming x tile (double-buffered)
                + 2 * H * I * 2           # resident bf16 weight (count 2x, safe)
                + 2 * I * 4               # bias
                + 2 * t * I * out_bytes)  # output tile (double-buffered)

    while tm > 128 and _working_set(tm) > int(vmem_limit * 0.7):
        tm //= 2

    M_pad = _round_up(M, tm)
    if M_pad != M:
        x2d = jnp.pad(x2d, ((0, M_pad - M), (0, 0)))

    grid = (M_pad // tm,)
    kernel = functools.partial(_bert_intermediate_kernel, act=act)

    out2d = pl.pallas_call(
        kernel,
        out_shape=jax.ShapeDtypeStruct((M_pad, I), out_dtype),
        grid_spec=pltpu.PrefetchScalarGridSpec(
            num_scalar_prefetch=0,
            grid=grid,
            in_specs=[
                # Activations stream along the (only) grid axis.
                pl.BlockSpec((tm, H), lambda i: (i, 0)),
                # Weight + bias have constant index maps -> fetched once,
                # stay resident in VMEM for the whole grid.
                pl.BlockSpec((H, I), lambda i: (0, 0)),
                pl.BlockSpec((1, I), lambda i: (0, 0)),
            ],
            out_specs=pl.BlockSpec((tm, I), lambda i: (i, 0)),
        ),
        compiler_params=pltpu.CompilerParams(
            dimension_semantics=("parallel",),
            vmem_limit_bytes=vmem_limit,
        ),
    )(x2d, w_bf, b_f32)

    if M_pad != M:
        out2d = out2d[:M]
    return out2d.reshape(*orig_shape[:-1], I)


# -------------------------------- main -------------------------------------- #
if __name__ == "__main__":
    # Small, module-consistent config: batch=2, seq=8, hidden=32, intermediate=64.
    B, S, H, I = 2, 8, 32, 64

    key = jax.random.PRNGKey(0)
    k_x, k_w, k_b = jax.random.split(key, 3)

    hidden_states = jax.random.normal(k_x, (B, S, H), jnp.float32)
    weight = jax.random.normal(k_w, (I, H), jnp.float32) * 0.02  # torch (out, in)
    bias = jax.random.normal(k_b, (I,), jnp.float32) * 0.02

    # One-time weight prep (simulates model init); NOT part of the forward path.
    w_bf, b_f32 = prepare_params(weight, bias)

    out = bert_intermediate(hidden_states, w_bf, b_f32, act="gelu")
    out = jax.block_until_ready(out)

    # Pure-JAX f32 reference (bf16 matmul operands + bf16 output -> loose tol).
    ref = _gelu_exact(hidden_states @ weight.T + bias)
    out_f32 = out.astype(jnp.float32)

    assert out.shape == (B, S, I)
    assert out.dtype == jnp.bfloat16
    assert bool(jnp.all(jnp.isfinite(out_f32)))
    assert bool(jnp.allclose(out_f32, ref, atol=3e-2, rtol=3e-2))
    print("KERNEL_OK")
</pallas_src>

<mosaic_0001>
module attributes {stable_mosaic.version = 11 : i64} {
  func.func @_bert_intermediate_kernel(%arg0: i32, %arg1: memref<16x32xf32, #tpu.memory_space<vmem>>, %arg2: memref<32x64xbf16, #tpu.memory_space<vmem>>, %arg3: memref<1x64xf32, #tpu.memory_space<vmem>>, %arg4: memref<16x64xbf16, #tpu.memory_space<vmem>>) attributes {dimension_semantics = [#tpu.dimension_semantics<parallel>], iteration_bounds = array<i64: 1>, scalar_prefetch = 0 : i64, scratch_operands = 0 : i64, tpu.core_type = #tpu.core_type<tc>, window_params = [{transform_indices = @transform_0, window_bounds = array<i64: 16, 32>}, {pipeline_mode = #tpu.pipeline_mode<synchronous>, transform_indices = @transform_1, window_bounds = array<i64: 32, 64>}, {pipeline_mode = #tpu.pipeline_mode<synchronous>, transform_indices = @transform_2, window_bounds = array<i64: 1, 64>}, {transform_indices = @transform_3, window_bounds = array<i64: 16, 64>}]} {
    %c0 = arith.constant 0 : index
    %c0_0 = arith.constant 0 : index
    %0 = vector.load %arg1[%c0, %c0_0] : memref<16x32xf32, #tpu.memory_space<vmem>>, vector<16x32xf32>
    %1 = arith.truncf %0 : vector<16x32xf32> to vector<16x32xbf16>
    %c0_1 = arith.constant 0 : index
    %c0_2 = arith.constant 0 : index
    %2 = vector.load %arg2[%c0_1, %c0_2] : memref<32x64xbf16, #tpu.memory_space<vmem>>, vector<32x64xbf16>
    %cst = arith.constant dense<0.000000e+00> : vector<16x64xf32>
    %3 = tpu.matmul %1, %2, %cst {dimension_numbers = #tpu.dot_dimension_numbers<[1], [0], [0], [1], [0, 0, 1, 1], [], []>} : vector<16x32xbf16>, vector<32x64xbf16>, vector<16x64xf32> -> vector<16x64xf32>
    %c0_3 = arith.constant 0 : index
    %c0_4 = arith.constant 0 : index
    %4 = vector.load %arg3[%c0_3, %c0_4] : memref<1x64xf32, #tpu.memory_space<vmem>>, vector<1x64xf32>
    %5 = vector.broadcast %4 : vector<1x64xf32> to vector<16x64xf32>
    %6 = arith.addf %3, %5 : vector<16x64xf32>
    %cst_5 = arith.constant 5.000000e-01 : f32
    %7 = vector.broadcast %cst_5 : f32 to vector<16x64xf32>
    %8 = arith.mulf %7, %6 : vector<16x64xf32>
    %cst_6 = arith.constant 0.707106769 : f32
    %9 = vector.broadcast %cst_6 : f32 to vector<16x64xf32>
    %10 = arith.mulf %6, %9 : vector<16x64xf32>
    %11 = math.erf %10 : vector<16x64xf32>
    %cst_7 = arith.constant 1.000000e+00 : f32
    %12 = vector.broadcast %cst_7 : f32 to vector<16x64xf32>
    %13 = arith.addf %12, %11 : vector<16x64xf32>
    %14 = arith.mulf %8, %13 : vector<16x64xf32>
    %15 = arith.truncf %14 : vector<16x64xf32> to vector<16x64xbf16>
    %c0_8 = arith.constant 0 : index
    %c0_9 = arith.constant 0 : index
    %16 = vector.load %arg4[%c0_8, %c0_9] : memref<16x64xbf16, #tpu.memory_space<vmem>>, vector<16x64xbf16>
    tpu.vector_store %arg4[%c0_8, %c0_9], %15 {strides = array<i32>} : memref<16x64xbf16, #tpu.memory_space<vmem>>, vector<16x64xbf16>,
    return
  }
  func.func @transform_0(%arg0: i32) -> (i32, i32) {
    %c0_i32 = arith.constant 0 : i32
    %c0_i32_0 = arith.constant 0 : i32
    return %arg0, %c0_i32 : i32, i32
  }
  func.func @transform_1(%arg0: i32) -> (i32, i32) {
    %c0_i32 = arith.constant 0 : i32
    %c0_i32_0 = arith.constant 0 : i32
    %c0_i32_1 = arith.constant 0 : i32
    return %c0_i32, %c0_i32_0 : i32, i32
  }
  func.func @transform_2(%arg0: i32) -> (i32, i32) {
    %c0_i32 = arith.constant 0 : i32
    %c0_i32_0 = arith.constant 0 : i32
    %c0_i32_1 = arith.constant 0 : i32
    return %c0_i32, %c0_i32_0 : i32, i32
  }
  func.func @transform_3(%arg0: i32) -> (i32, i32) {
    %c0_i32 = arith.constant 0 : i32
    %c0_i32_0 = arith.constant 0 : i32
    return %arg0, %c0_i32 : i32, i32
  }
}

</mosaic_0001>

<llo_original>
// kernel: tpu_custom_call.1
$region0: #{tpu_custom_call.1}
  #allocation0 [shape = 'u32[]', space=smem, size = 0x4, offset = 0x4, fixed_abs, tag = 'smem constant byte address 0x4 - core index']
  #allocation1 [shape = 'u32[72,128]{1,0:T(1,128)}', space=vmem, size = 0x9000, scoped, tag = 'internal scratch']
  %s0 = inlined_call_operand.hbm [shape: f32[16,32], index: 0, kind: input, shape index: {}]
  %s1 = inlined_call_operand.hbm [shape: bf16[32,64], index: 1, kind: input, shape index: {}]
  %s2 = inlined_call_operand.vmem [shape: f32[1,64], index: 2, kind: input, shape index: {}]
  %s3 = inlined_call_operand.hbm [shape: bf16[16,64], index: 3, kind: output, shape index: {}]
  %s4 = sld [smem:[#allocation0]]
  $region30: #{tpu_custom_call.1} parent=0
    _
  %s6 = ssub.s32 1, %s4
  %s7 = scalar_select 0, %s6, %s4
  $region1: #{tpu_custom_call.1} parent=0
    #allocation2 [shape = 'u8[8192]{0}', space=vmem, size = 0x2000, scoped, tag = 'input window, operand 0, single buffered']
    #allocation3 [shape = 's32[1]{0}', space=sflag, size = 0x4, scoped, tag = 'scoped memory for tpu_custom_call.1']
    #allocation4 [shape = 's32[1]{0}', space=sflag, size = 0x4, scoped, tag = 'scoped memory for tpu_custom_call.1']
    #allocation5 [shape = 'u8[8192]{0}', space=vmem, size = 0x2000, scoped, tag = 'input window, operand 1, single buffered']
    #allocation6 [shape = 's32[1]{0}', space=sflag, size = 0x4, scoped, tag = 'scoped memory for tpu_custom_call.1']
    #allocation7 [shape = 'u8[4096]{0}', space=vmem, size = 0x1000, scoped, tag = 'output window, operand 0, single buffered']
    %8 = vsyncpa [#allocation3], 0
    %9 = vsyncpa [#allocation6], 0
    %10 = vsyncpa [#allocation4], 0
    // Predicated region
    $region2: #{tpu_custom_call.1} parent=1 // pred_check
      _
    $region3: #{tpu_custom_call.1} parent=1 // pred_check_branch
      %12 = sbr.rel (0) target = $region5
    $region4: #{tpu_custom_call.1} parent=1 // pred_region
      %14 = vsyncadd [#allocation3], 0
      %s15 = sshll.u32 %s0, 4
      %s16 = int_to_ptr.hbm [resolvable:$true] %s15
      %s17 = sshll.u32 [#allocation2], 4
      %s18 = int_to_ptr.vmem [resolvable:$true] %s17
      %23 = dma.hbm_to_vmem [thread:$0]  %s16, 256, %s18, [#allocation3], 128, 128, 8
    $region5: #{tpu_custom_call.1} parent=1 // pred_fallthru
      _
    // Predicated region
    $region6: #{tpu_custom_call.1} parent=1 // pred_check
      _
    $region7: #{tpu_custom_call.1} parent=1 // pred_check_branch
      %25 = sbr.rel (0) target = $region9
    $region8: #{tpu_custom_call.1} parent=1 // pred_region
      %27 = vsyncadd [#allocation6], 0
      %s28 = sshll.u32 %s1, 4
      %s29 = int_to_ptr.hbm [resolvable:$true] %s28
      %s30 = sshll.u32 [#allocation5], 4
      %s31 = int_to_ptr.vmem [resolvable:$true] %s30
      %36 = dma.hbm_to_vmem [thread:$0]  %s29, 256, %s31, [#allocation6], 64, 64, 4
    $region9: #{tpu_custom_call.1} parent=1 // pred_fallthru
      _
    // Predicated region
    $region10: #{tpu_custom_call.1} parent=1 // pred_check
      _
    $region11: #{tpu_custom_call.1} parent=1 // pred_check_branch
      %38 = sbr.rel (0) target = $region13
    $region12: #{tpu_custom_call.1} parent=1 // pred_region
      _
    $region13: #{tpu_custom_call.1} parent=1 // pred_fallthru
      _
    // Predicated region
    $region14: #{tpu_custom_call.1} parent=1 // pred_check
      _
    $region15: #{tpu_custom_call.1} parent=1 // pred_check_branch
      %40 = sbr.rel (0) target = $region17
    $region16: #{tpu_custom_call.1} parent=1 // pred_region
      %42 = dma.done [#allocation3], 256
    $region17: #{tpu_custom_call.1} parent=1 // pred_fallthru
      _
    // Predicated region
    $region18: #{tpu_custom_call.1} parent=1 // pred_check
      _
    $region19: #{tpu_custom_call.1} parent=1 // pred_check_branch
      %44 = sbr.rel (0) target = $region21
    $region20: #{tpu_custom_call.1} parent=1 // pred_region
      %46 = dma.done [#allocation6], 256
    $region21: #{tpu_custom_call.1} parent=1 // pred_fallthru
      _
    %v48 = vld [vmem:[#allocation2] sm:$0xff]
    %v49 = vld [vmem:[#allocation2 + $0x8] sm:$0xff]
    %v50 = vpack.c.bf16 %v49, %v48
    %v51 = vld [vmem:[#allocation5] sm:$0xf]
    %v52 = vld [vmem:[#allocation5 + $0x4] sm:$0xf]
    %v53 = vld [vmem:[#allocation5 + $0x8] sm:$0xf]
    %v54 = vld [vmem:[#allocation5 + $0xc] sm:$0xf]
    %v55 = vld [vmem:[%s2] sm:$0x1]
    %v57 = vperm.slane %v55, 0
    %v63 = vunpack.c.l.b16 %v51
    %v64 = vunpack.c.l.b16 %v52
    %v65 = vunpack.c.l.b16 %v53
    %v66 = vunpack.c.l.b16 %v54
    %v67 = vpack.c.b16 %v64, %v63
    %v68 = vpack.c.b16 %v66, %v65
    %vm71 = vcmask 261120
    %v73 = vsel %vm71, %v50, 0
    %75 = vmatpush.bf16.msra.mxu0 0
    %76 = vmatpush.bf16.msra.mxu0 0
    %77 = vmatpush.bf16.msra.mxu0 0
    %78 = vmatpush.bf16.msra.mxu0 0
    %79 = vmatpush.bf16.msra.mxu0 0
    %80 = vmatpush.bf16.msra.mxu0 0
    %81 = vmatpush.bf16.msra.mxu0 %v68
    %82 = vmatpush.bf16.msra.mxu0 %v67
    %83 = vmatmul.bf16.gmra.mxu0 %v73
    %v84 = vpop.f32.mrf.mxu0
    %v85 = vadd.f32 %v57, %v84
    %v86 = vpop.f32.mrf.mxu0
    %v87 = vadd.f32 %v57, %v86
    %88 = vdwg.mxu0
    %v89 = vmul.f32 %v85, 0.5
    %v90 = vmul.f32 %v87, 0.5
    %v91 = vmul.f32 %v85, 0.70710677
    %v92 = vmul.f32 %v87, 0.70710677
    %v93 = vmul.f32 %v91, %v91
    %v94 = vmin.f32 16.0, %v93
    %v95 = vmul.f32 %v94, 2.1237322e-06
    %v96 = vadd.f32 %v95, 0.00028619796
    %v97 = vmul.f32 %v94, %v96
    %v98 = vadd.f32 %v97, 0.0036580483
    %v99 = vmul.f32 %v94, %v98
    %v100 = vadd.f32 %v99, 0.05243302
    %v101 = vmul.f32 %v94, %v100
    %v102 = vadd.f32 %v101, 0.18741608
    %v103 = vmul.f32 %v94, %v102
    %v104 = vadd.f32 %v103, 1.1283791
    %v105 = vmul.f32 %v91, %v104
    %v106 = vmul.f32 %v94, 3.8918573e-05
    %v107 = vadd.f32 %v106, 0.001143296
    %v108 = vmul.f32 %v94, %v107
    %v109 = vadd.f32 %v108, 0.014752088
    %v110 = vmul.f32 %v94, %v109
    %v111 = vadd.f32 %v110, 0.112945676
    %v112 = vmul.f32 %v94, %v111
    %v113 = vadd.f32 %v112, 0.4994258
    %v114 = vmul.f32 %v94, %v113
    %v115 = vadd.f32 %v114, 1.0
    %v116 = vrcp.pop %v115
    %v117 = vmul.f32 %v115, %v116
    %v118 = vsub.f32 1.0, %v117
    %v119 = vmul.f32 %v116, %v118
    %v120 = vadd.f32 %v116, %v119
    %vm121 = vweird.f32 %v115
    %vm122 = vweird.f32 %v116
    %vm123 = vmor %vm121, %vm122
    %v124 = vsel %vm123, %v116, %v120
    %v125 = vand.u32 2147483647, %v115
    %vm126 = vcmp.eq.f32.partialorder %v125, 8.507059e+37
    %v127 = vand.u32 %v115, 2147483648
    %v128 = vor.u32 1.1754944e-38, %v127
    %v129 = vsel %vm126, %v128, %v124
    %v130 = vmul.f32 %v105, %v129
    %v131 = vmin.f32 %v130, 1.0
    %v132 = vmax.f32 %v131, -1.0
    %v133 = vmul.f32 %v92, %v92
    %v134 = vmin.f32 16.0, %v133
    %v135 = vmul.f32 %v134, 2.1237322e-06
    %v136 = vadd.f32 %v135, 0.00028619796
    %v137 = vmul.f32 %v134, %v136
    %v138 = vadd.f32 %v137, 0.0036580483
    %v139 = vmul.f32 %v134, %v138
    %v140 = vadd.f32 %v139, 0.05243302
    %v141 = vmul.f32 %v134, %v140
    %v142 = vadd.f32 %v141, 0.18741608
    %v143 = vmul.f32 %v134, %v142
    %v144 = vadd.f32 %v143, 1.1283791
    %v145 = vmul.f32 %v92, %v144
    %v146 = vmul.f32 %v134, 3.8918573e-05
    %v147 = vadd.f32 %v146, 0.001143296
    %v148 = vmul.f32 %v134, %v147
    %v149 = vadd.f32 %v148, 0.014752088
    %v150 = vmul.f32 %v134, %v149
    %v151 = vadd.f32 %v150, 0.112945676
    %v152 = vmul.f32 %v134, %v151
    %v153 = vadd.f32 %v152, 0.4994258
    %v154 = vmul.f32 %v134, %v153
    %v155 = vadd.f32 %v154, 1.0
    %v156 = vrcp.pop %v155
    %v157 = vmul.f32 %v155, %v156
    %v158 = vsub.f32 1.0, %v157
    %v159 = vmul.f32 %v156, %v158
    %v160 = vadd.f32 %v156, %v159
    %vm161 = vweird.f32 %v155
    %vm162 = vweird.f32 %v156
    %vm163 = vmor %vm161, %vm162
    %v164 = vsel %vm163, %v156, %v160
    %v165 = vand.u32 2147483647, %v155
    %vm166 = vcmp.eq.f32.partialorder %v165, 8.507059e+37
    %v167 = vand.u32 %v155, 2147483648
    %v168 = vor.u32 1.1754944e-38, %v167
    %v169 = vsel %vm166, %v168, %v164
    %v170 = vmul.f32 %v145, %v169
    %v171 = vmin.f32 %v170, 1.0
    %v172 = vmax.f32 %v171, -1.0
    %v173 = vadd.f32 %v132, 1.0
    %v174 = vadd.f32 %v172, 1.0
    %v175 = vmul.f32 %v89, %v173
    %v176 = vmul.f32 %v90, %v174
    %v177 = vpack.c.bf16 %v175, %v175
    %v178 = vpack.c.bf16 %v176, %v176
    %vm179 = vcmask 519168
    %180 = vst.msk [vmem:[#allocation7] sm:$0xf] %vm179, %v177
    %181 = vst.msk [vmem:[#allocation7 + $0x4] sm:$0xf] %vm179, %v178
    // Predicated region
    $region22: #{tpu_custom_call.1} parent=1 // pred_check
      _
    $region23: #{tpu_custom_call.1} parent=1 // pred_check_branch
      %183 = sbr.rel (0) target = $region25
    $region24: #{tpu_custom_call.1} parent=1 // pred_region
      %185 = vsyncadd [#allocation4], 0
      %s186 = sshll.u32 [#allocation7], 4
      %s187 = int_to_ptr.vmem [resolvable:$true] %s186
      %s188 = sshll.u32 %s3, 4
      %s189 = int_to_ptr.hbm [resolvable:$true] %s188
      %194 = dma.vmem_to_hbm [thread:$0]  %s187, 128, %s189, [#allocation4], 64, 64, 4
    $region25: #{tpu_custom_call.1} parent=1 // pred_fallthru
      _
    // Predicated region
    $region26: #{tpu_custom_call.1} parent=1 // pred_check
      _
    $region27: #{tpu_custom_call.1} parent=1 // pred_check_branch
      %196 = sbr.rel (0) target = $region29
    $region28: #{tpu_custom_call.1} parent=1 // pred_region
      %198 = dma.done [#allocation4], 128
    $region29: #{tpu_custom_call.1} parent=1 // pred_fallthru
      _
    %199 = vsyncpa [#allocation3], 1
    %200 = vsyncpa [#allocation6], 1
    %201 = vsyncpa [#allocation4], 1

</llo_original>
